<compile_context>
chip_gen: v6e
topology: v6e:2x2x1
jax: 0.10.0
libtpu: 0.0.40
codegen_flags: <defaults>
</compile_context>

<pallas_src>
import jax
import jax.numpy as jnp
from jax.experimental import pallas as pl
from jax.experimental.pallas import tpu as pltpu


# ---------------------------------------------------------------------------
# Kernel factory: one (TS, D) tile of x for one batch element.
# Scratch cos/sin persist across grid steps; recomputed only when the inner
# (batch) index is 0, i.e. once per sequence tile.
# ---------------------------------------------------------------------------
def _make_rope_kernel(Dh, use_roll):
    def kernel(table_ref, x_ref, o_ref, cos_ref, sin_ref):
        s_idx = pl.program_id(0)            # sequence-tile index (outer, "parallel")
        b_idx = pl.program_id(1)            # batch index         (inner, "arbitrary")
        TS = cos_ref.shape[0]

        @pl.when(b_idx == 0)
        def _():
            pos = (s_idx * TS
                   + jax.lax.broadcasted_iota(jnp.int32, cos_ref.shape, 0)
                   ).astype(jnp.float32)
            angle = pos * table_ref[...]     # (TS, Dw) <- broadcast of (1, Dw)
            cos_ref[...] = jnp.cos(angle)
            sin_ref[...] = jnp.sin(angle)    # roll path: sign already baked in

        if use_roll:
            # Full-width path: roll goes to the XLU; loads/stores stay unmasked.
            x = x_ref[...]                                   # (TS, D), input dtype
            xr = pltpu.roll(x, shift=Dh, axis=-1)            # concat(x2, x1)
            o_ref[...] = (x.astype(jnp.float32) * cos_ref[...]
                          + xr.astype(jnp.float32) * sin_ref[...]
                          ).astype(o_ref.dtype)
        else:
            # Half-split path: direct per-half loads/stores, f32 math per half.
            cos = cos_ref[...]
            sin = sin_ref[...]
            x1 = x_ref[:, :Dh].astype(jnp.float32)
            x2 = x_ref[:, Dh:].astype(jnp.float32)
            o_ref[:, :Dh] = (x1 * cos - x2 * sin).astype(o_ref.dtype)
            o_ref[:, Dh:] = (x2 * cos + x1 * sin).astype(o_ref.dtype)

    return kernel


# ---------------------------------------------------------------------------
# Tiling helpers
# ---------------------------------------------------------------------------
def _vmem_budget():
    """(max_tile_bytes, vmem_limit_bytes) sized per TPU generation."""
    try:
        cap = pltpu.get_tpu_info().vmem_capacity_bytes
    except Exception:
        cap = 64 * 1024 * 1024               # conservative default
    if cap <= 64 * 1024 * 1024:               # v7x-class: 64 MiB per core
        return 4 << 20, 48 * 1024 * 1024
    return 8 << 20, 96 * 1024 * 1024          # v5e / v6e: 128 MiB


def _pick_seq_tile(S, D, itemsize, row_tile, max_tile_bytes):
    """Largest sequence tile (multiple of row_tile rows) fitting the budget."""
    if S * D * itemsize <= max_tile_bytes:
        ts = S
    else:
        ts = (max_tile_bytes // (D * itemsize)) // row_tile * row_tile
        ts = max(row_tile, min(ts, S))
    # If the whole sequence fits one tile, split it so the "parallel" axis has
    # >= 2 blocks and can be sharded across v7x's two TensorCores.
    if ts >= S and S >= 2 * row_tile:
        half = -(-((S + 1) // 2) // row_tile) * row_tile
        ts = max(row_tile, min(ts, half))
    return int(ts)


# ---------------------------------------------------------------------------
# Wrapper matching RotaryPositionalEncoding(d_model, max_len, base).forward(x, seq_len)
# ---------------------------------------------------------------------------
def rotary_positional_encoding(x, *, base=10000.0, max_len=2048, seq_len=None):
    B, S, D = x.shape
    if seq_len is None:
        seq_len = S
    assert seq_len == S, "kernel applies RoPE over the actual sequence length of x"
    assert S <= max_len
    assert D % 2 == 0, "d_model must be even for RoPE"
    Dh = D // 2

    # inv_freq = 1 / base^(2i / d_model), i = 0..Dh-1  (tiny constant table)
    inv_freq = 1.0 / (base ** (jnp.arange(0, D, 2, dtype=jnp.float32) / D))

    aligned_half = (Dh % 128 == 0)
    use_roll = (not aligned_half) and (D % 128 == 0)
    if use_roll:
        # Sign of the first half baked into the angle: sin(-a) = -sin(a), cos even.
        table = jnp.concatenate([-inv_freq, inv_freq]).reshape(1, D)
    else:
        table = inv_freq.reshape(1, Dh)
    Dw = table.shape[-1]

    itemsize = jnp.dtype(x.dtype).itemsize
    row_tile = max(8, 32 // itemsize)          # 8 f32 / 16 bf16 / 32 int8
    max_tile_bytes, vmem_cap_limit = _vmem_budget()
    TS = _pick_seq_tile(S, D, itemsize, row_tile, max_tile_bytes)
    grid = (pl.cdiv(S, TS), B)                 # sequence tiles outer, batch inner

    block_bytes = TS * D * itemsize
    scratch_bytes = 2 * TS * Dw * 4
    vmem_limit = int(min(vmem_cap_limit,
                         max(32 * 1024 * 1024,
                             4 * block_bytes + scratch_bytes + (2 << 20))))

    kernel = _make_rope_kernel(Dh, use_roll)

    return pl.pallas_call(
        kernel,
        out_shape=jax.ShapeDtypeStruct((B, S, D), x.dtype),
        grid=grid,
        in_specs=[
            pl.BlockSpec((1, Dw), lambda s, b: (0, 0)),               # angle table
            pl.BlockSpec((pl.Squeezed(), TS, D), lambda s, b: (b, s, 0)),  # x tile
        ],
        out_specs=pl.BlockSpec((pl.Squeezed(), TS, D), lambda s, b: (b, s, 0)),
        scratch_shapes=[
            pltpu.VMEM((TS, Dw), jnp.float32),   # cos table for current seq tile
            pltpu.VMEM((TS, Dw), jnp.float32),   # sin table (sign baked in if roll)
        ],
        compiler_params=pltpu.CompilerParams(
            dimension_semantics=("parallel", "arbitrary"),
            vmem_limit_bytes=vmem_limit,
        ),
    )(table, x)


# ---------------------------------------------------------------------------
# Pure-JAX reference (mirrors the PyTorch module exactly)
# ---------------------------------------------------------------------------
def _reference_rope(x, base=10000.0):
    B, S, D = x.shape
    inv_freq = 1.0 / (base ** (jnp.arange(0, D, 2, dtype=jnp.float32) / D))
    t = jnp.arange(S, dtype=jnp.float32)
    freqs = jnp.einsum("i,j->ij", t, inv_freq)
    emb = jnp.concatenate([freqs, freqs], axis=-1)
    cos_emb = jnp.cos(emb)[None, :, :]
    sin_emb = jnp.sin(emb)[None, :, :]
    x1, x2 = x[..., : D // 2], x[..., D // 2:]
    rot = jnp.concatenate([-x2, x1], axis=-1)
    return x * cos_emb + rot * sin_emb


if __name__ == "__main__":
    # Case 1: small, lane-unaligned d_model (D/2 = 16) -> masked half-store path.
    key = jax.random.PRNGKey(0)
    B, S, D, MAX_LEN = 2, 8, 32, 64
    x = jax.random.normal(key, (B, S, D), dtype=jnp.float32)
    ref = _reference_rope(x, base=10000.0)
    out = jax.block_until_ready(rotary_positional_encoding(x, base=10000.0, max_len=MAX_LEN))
    assert out.shape == (B, S, D)
    assert jnp.allclose(out, ref, atol=1e-4, rtol=1e-4), "RoPE mismatch (D=32)"

    # Case 2: lane-aligned d_model (D/2 = 128) and >1 sequence tile.
    B2, S2, D2 = 2, 16, 256
    x2 = jax.random.normal(jax.random.PRNGKey(1), (B2, S2, D2), dtype=jnp.float32)
    ref2 = _reference_rope(x2, base=10000.0)
    out2 = jax.block_until_ready(rotary_positional_encoding(x2, base=10000.0, max_len=64))
    assert out2.shape == (B2, S2, D2)
    assert jnp.allclose(out2, ref2, atol=1e-4, rtol=1e-4), "RoPE mismatch (D=256)"

    print("KERNEL_OK")
</pallas_src>

<mosaic_0001>
module attributes {stable_mosaic.version = 11 : i64} {
  func.func @kernel(%arg0: i32, %arg1: i32, %arg2: memref<1x16xf32, #tpu.memory_space<vmem>>, %arg3: memref<1x8x32xf32, #tpu.memory_space<vmem>>, %arg4: memref<1x8x32xf32, #tpu.memory_space<vmem>>, %arg5: memref<8x16xf32, #tpu.memory_space<vmem>>, %arg6: memref<8x16xf32, #tpu.memory_space<vmem>>) attributes {dimension_semantics = [#tpu.dimension_semantics<parallel>, #tpu.dimension_semantics<arbitrary>], iteration_bounds = array<i64: 1, 2>, scalar_prefetch = 0 : i64, scratch_operands = 2 : i64, tpu.core_type = #tpu.core_type<tc>, window_params = [{pipeline_mode = #tpu.pipeline_mode<synchronous>, transform_indices = @transform_0, window_bounds = array<i64: 1, 16>}, {transform_indices = @transform_1, window_bounds = array<i64: 1, 8, 32>}, {transform_indices = @transform_2, window_bounds = array<i64: 1, 8, 32>}]} {
    %c0_i32 = arith.constant 0 : i32
    %0 = arith.cmpi eq, %arg1, %c0_i32 : i32
    %1 = arith.extui %0 : i1 to i32
    %c0_i32_0 = arith.constant 0 : i32
    %2 = arith.cmpi ne, %1, %c0_i32_0 : i32
    scf.if %2 {
      %c8_i32 = arith.constant 8 : i32
      %21 = arith.muli %arg0, %c8_i32 : i32
      %22 = tpu.iota {dimensions = array<i32: 0>} : vector<8x16xi32>
      %23 = vector.broadcast %21 : i32 to vector<8x16xi32>
      %24 = arith.addi %23, %22 : vector<8x16xi32>
      %25 = arith.sitofp %24 : vector<8x16xi32> to vector<8x16xf32>
      %c0_15 = arith.constant 0 : index
      %c0_16 = arith.constant 0 : index
      %26 = vector.load %arg2[%c0_15, %c0_16] : memref<1x16xf32, #tpu.memory_space<vmem>>, vector<1x16xf32>
      %27 = vector.broadcast %26 : vector<1x16xf32> to vector<8x16xf32>
      %28 = arith.mulf %25, %27 : vector<8x16xf32>
      %29 = math.cos %28 : vector<8x16xf32>
      %c0_17 = arith.constant 0 : index
      %c0_18 = arith.constant 0 : index
      %30 = vector.load %arg5[%c0_17, %c0_18] : memref<8x16xf32, #tpu.memory_space<vmem>>, vector<8x16xf32>
      tpu.vector_store %arg5[%c0_17, %c0_18], %29 {strides = array<i32>} : memref<8x16xf32, #tpu.memory_space<vmem>>, vector<8x16xf32>,
      %31 = math.sin %28 : vector<8x16xf32>
      %c0_19 = arith.constant 0 : index
      %c0_20 = arith.constant 0 : index
      %32 = vector.load %arg6[%c0_19, %c0_20] : memref<8x16xf32, #tpu.memory_space<vmem>>, vector<8x16xf32>
      tpu.vector_store %arg6[%c0_19, %c0_20], %31 {strides = array<i32>} : memref<8x16xf32, #tpu.memory_space<vmem>>, vector<8x16xf32>,
    } else {
    }
    %c0 = arith.constant 0 : index
    %c0_1 = arith.constant 0 : index
    %3 = vector.load %arg5[%c0, %c0_1] : memref<8x16xf32, #tpu.memory_space<vmem>>, vector<8x16xf32>
    %c0_2 = arith.constant 0 : index
    %c0_3 = arith.constant 0 : index
    %4 = vector.load %arg6[%c0_2, %c0_3] : memref<8x16xf32, #tpu.memory_space<vmem>>, vector<8x16xf32>
    %c0_4 = arith.constant 0 : index
    %c0_5 = arith.constant 0 : index
    %c0_6 = arith.constant 0 : index
    %5 = vector.load %arg3[%c0_4, %c0_5, %c0_6] : memref<1x8x32xf32, #tpu.memory_space<vmem>>, vector<1x8x16xf32>
    %6 = vector.shape_cast %5 : vector<1x8x16xf32> to vector<8x16xf32>
    %c0_7 = arith.constant 0 : index
    %c0_8 = arith.constant 0 : index
    %c16 = arith.constant 16 : index
    %7 = vector.load %arg3[%c0_7, %c0_8, %c16] : memref<1x8x32xf32, #tpu.memory_space<vmem>>, vector<1x8x16xf32>
    %8 = vector.shape_cast %7 : vector<1x8x16xf32> to vector<8x16xf32>
    %9 = arith.mulf %6, %3 : vector<8x16xf32>
    %10 = arith.mulf %8, %4 : vector<8x16xf32>
    %11 = arith.subf %9, %10 : vector<8x16xf32>
    %c0_9 = arith.constant 0 : index
    %c0_10 = arith.constant 0 : index
    %c0_11 = arith.constant 0 : index
    %12 = vector.load %arg4[%c0_9, %c0_10, %c0_11] : memref<1x8x32xf32, #tpu.memory_space<vmem>>, vector<1x8x16xf32>
    %13 = vector.shape_cast %12 : vector<1x8x16xf32> to vector<8x16xf32>
    %14 = vector.shape_cast %11 : vector<8x16xf32> to vector<1x8x16xf32>
    tpu.vector_store %arg4[%c0_9, %c0_10, %c0_11], %14 {strides = array<i32>} : memref<1x8x32xf32, #tpu.memory_space<vmem>>, vector<1x8x16xf32>,
    %15 = arith.mulf %8, %3 : vector<8x16xf32>
    %16 = arith.mulf %6, %4 : vector<8x16xf32>
    %17 = arith.addf %15, %16 : vector<8x16xf32>
    %c0_12 = arith.constant 0 : index
    %c0_13 = arith.constant 0 : index
    %c16_14 = arith.constant 16 : index
    %18 = vector.load %arg4[%c0_12, %c0_13, %c16_14] : memref<1x8x32xf32, #tpu.memory_space<vmem>>, vector<1x8x16xf32>
    %19 = vector.shape_cast %18 : vector<1x8x16xf32> to vector<8x16xf32>
    %20 = vector.shape_cast %17 : vector<8x16xf32> to vector<1x8x16xf32>
    tpu.vector_store %arg4[%c0_12, %c0_13, %c16_14], %20 {strides = array<i32>} : memref<1x8x32xf32, #tpu.memory_space<vmem>>, vector<1x8x16xf32>,
    return
  }
  func.func @transform_0(%arg0: i32, %arg1: i32) -> (i32, i32) {
    %c0_i32 = arith.constant 0 : i32
    %c0_i32_0 = arith.constant 0 : i32
    %c0_i32_1 = arith.constant 0 : i32
    return %c0_i32, %c0_i32_0 : i32, i32
  }
  func.func @transform_1(%arg0: i32, %arg1: i32) -> (i32, i32, i32) {
    %c0_i32 = arith.constant 0 : i32
    %c0_i32_0 = arith.constant 0 : i32
    return %arg1, %arg0, %c0_i32 : i32, i32, i32
  }
  func.func @transform_2(%arg0: i32, %arg1: i32) -> (i32, i32, i32) {
    %c0_i32 = arith.constant 0 : i32
    %c0_i32_0 = arith.constant 0 : i32
    return %arg1, %arg0, %c0_i32 : i32, i32, i32
  }
}

</mosaic_0001>

<llo_original>
// kernel: tpu_custom_call.1
$region0: #{tpu_custom_call.1}
  #allocation0 [shape = 'u32[]', space=smem, size = 0x4, offset = 0x4, fixed_abs, tag = 'smem constant byte address 0x4 - core index']
  #allocation1 [shape = 'u32[144,128]{1,0:T(1,128)}', space=vmem, size = 0x12000, scoped, tag = 'internal scratch']
  #allocation2 [shape = 'f32[8,16]{1,0:T(8,128)}', space=vmem, size = 0x1000, scoped, tag = 'scratch operand']
  #allocation3 [shape = 'f32[8,16]{1,0:T(8,128)}', space=vmem, size = 0x1000, scoped, tag = 'scratch operand']
  %s0 = inlined_call_operand.hbm [shape: f32[1,16], index: 0, kind: input, shape index: {}]
  %s1 = inlined_call_operand.hbm [shape: f32[2,8,32], index: 1, kind: input, shape index: {}]
  %s2 = inlined_call_operand.hbm [shape: f32[2,8,32], index: 2, kind: output, shape index: {}]
  %s3 = sld [smem:[#allocation0]]
  $region53: #{tpu_custom_call.1} parent=0
    _
  %s5 = ssub.s32 1, %s3
  %s6 = scalar_select 0, %s5, %s3
  $region1: #{tpu_custom_call.1} parent=0
    #allocation4 [shape = 'u8[512]{0}', space=vmem, size = 0x400, scoped, tag = 'input window, operand 0, single buffered']
    #allocation5 [shape = 's32[2]{0}', space=sflag, size = 0x8, scoped, tag = 'scoped memory for tpu_custom_call.1']
    #allocation6 [shape = 's32[2]{0}', space=sflag, size = 0x8, scoped, tag = 'scoped memory for tpu_custom_call.1']
    #allocation7 [shape = 'u8[8192]{0}', space=vmem, size = 0x2000, scoped, tag = 'input window, operand 1']
    #allocation8 [shape = 's32[2]{0}', space=sflag, size = 0x8, scoped, tag = 'scoped memory for tpu_custom_call.1']
    #allocation9 [shape = 'u8[8192]{0}', space=vmem, size = 0x2000, scoped, tag = 'output window, operand 0']
    %7 = vsyncpa [#allocation5], 0
    %8 = vsyncpa [#allocation8], 0
    %s9 = scalar_lea.sflag [#allocation8], 1
    %10 = vsyncpa %s9, 0
    %11 = vsyncpa [#allocation6], 0
    %s12 = scalar_lea.sflag [#allocation6], 1
    %13 = vsyncpa %s12, 0
    loop: start=0, step=1, limit=4
    $region2: #{tpu_custom_call.1} parent=1 // loop_pre_header
      _
    $region3: #{tpu_custom_call.1} parent=1 // loop_header
      %s15 = sphi 0, %s19
      %p16 = scmp.ge.s32.totalorder %s15, 4
      %s22 = sphi 0, %s34
      %s23 = sphi 0, %s30
      %s24 = sphi 0, %s22
      %s25 = sphi 0, %s23
      %s26 = sphi 0, %s24
      %s27 = sphi 0, %s25
      %s35 = sphi 0, %s35
      %s37 = sphi 0, %s35
      %s38 = sphi 0, %s37
      %s52 = sphi 0, %s38
      %s60 = sphi 0, %s62
      %s63 = sphi 0, %s60
      %s64 = sphi 0, %s63
      %s80 = sphi 0, %s64
      %s88 = sphi 0, %s90
      %s91 = sphi 0, %s88
      %s92 = sphi 0, %s91
      %s108 = sphi 0, %s92
    $region4: #{tpu_custom_call.1} parent=1 // loop_header_branch
      %18 = sbr.rel (%p16) target = $region8
    $region5: #{tpu_custom_call.1} parent=1 // loop_body
      %s20 = ssub.s32 %s15, 1
      %s21 = ssub.s32 %s15, 2
      %s28 = sadd.s32 1, %s23
      %p29 = scmp.ge.s32.totalorder %s28, 2
      %s30 = scalar_select %p29, 0, %s28
      %s31 = sadd.s32 1, %s22
      %s32 = scalar_select %p29, %s31, %s22
      %p33 = scmp.ge.s32.totalorder %s32, 1
      %s34 = scalar_select %p33, 0, %s32
      %s36 = sadd.s32 %s35, 1
      %p39 = scmp.eq.s32.totalorder %s15, 1
      %p40 = scmp.ne.s32.totalorder %s35, %s37
      %p41 = scmp.eq.s32.totalorder %s15, 0
      %p42 = por %p40, %p41
      %p43 = scmp.ne.s32.totalorder %s35, %s37
      %p44 = scmp.eq.s32.totalorder %s20, 1
      %p45 = por %p43, %p44
      %p46 = scmp.ne.s32.totalorder %s37, %s38
      %p47 = scmp.eq.s32.totalorder %s20, 0
      %p48 = por %p46, %p47
      %p49 = scmp.ne.s32.totalorder %s37, %s38
      %p50 = scmp.eq.s32.totalorder %s21, 1
      %p51 = por %p49, %p50
      %p53 = scmp.ne.s32.totalorder %s38, %s52
      %p54 = scmp.eq.s32.totalorder %s21, 0
      %p55 = por %p53, %p54
      %s56 = ssub.s32 %s23, %s30
      %s57 = ssub.s32 %s22, %s34
      %s58 = sor.u32 %s56, %s57
      %p59 = scmp.eq.s32.totalorder %s58, 0
      %s61 = sadd.s32 %s60, 1
      %s62 = scalar_select %p59, %s60, %s61
      %p65 = pneg %p59
      %p66 = scmp.eq.s32.totalorder %s15, 1
      %p67 = por %p65, %p66
      %p68 = scmp.ne.s32.totalorder %s60, %s63
      %p69 = scmp.eq.s32.totalorder %s15, 0
      %p70 = por %p68, %p69
      %p71 = scmp.ne.s32.totalorder %s60, %s63
      %p72 = scmp.eq.s32.totalorder %s20, 1
      %p73 = por %p71, %p72
      %p74 = scmp.ne.s32.totalorder %s63, %s64
      %p75 = scmp.eq.s32.totalorder %s20, 0
      %p76 = por %p74, %p75
      %p77 = scmp.ne.s32.totalorder %s63, %s64
      %p78 = scmp.eq.s32.totalorder %s21, 1
      %p79 = por %p77, %p78
      %p81 = scmp.ne.s32.totalorder %s64, %s80
      %p82 = scmp.eq.s32.totalorder %s21, 0
      %p83 = por %p81, %p82
      %s84 = ssub.s32 %s23, %s30
      %s85 = ssub.s32 %s22, %s34
      %s86 = sor.u32 %s84, %s85
      %p87 = scmp.eq.s32.totalorder %s86, 0
      %s89 = sadd.s32 %s88, 1
      %s90 = scalar_select %p87, %s88, %s89
      %p93 = pneg %p87
      %p94 = scmp.eq.s32.totalorder %s15, 1
      %p95 = por %p93, %p94
      %p96 = scmp.ne.s32.totalorder %s88, %s91
      %p97 = scmp.eq.s32.totalorder %s15, 0
      %p98 = por %p96, %p97
      %p99 = scmp.ne.s32.totalorder %s88, %s91
      %p100 = scmp.eq.s32.totalorder %s20, 1
      %p101 = por %p99, %p100
      %p102 = scmp.ne.s32.totalorder %s91, %s92
      %p103 = scmp.eq.s32.totalorder %s20, 0
      %p104 = por %p102, %p103
      %p105 = scmp.ne.s32.totalorder %s91, %s92
      %p106 = scmp.eq.s32.totalorder %s21, 1
      %p107 = por %p105, %p106
      %p109 = scmp.ne.s32.totalorder %s92, %s108
      %p110 = scmp.eq.s32.totalorder %s21, 0
      %p111 = por %p109, %p110
      %p112 = scmp.le.s32.totalorder 1, %s15
      %p113 = scmp.lt.s32.totalorder %s15, 3
      %p114 = pnand %p112, %p113
      %p115 = pneg %p114
      // Predicated region
      $region9: #{tpu_custom_call.1} parent=5 // pred_check
        _
      $region10: #{tpu_custom_call.1} parent=5 // pred_check_branch
        %117 = sbr.rel (%p114) target = $region12
      $region11: #{tpu_custom_call.1} parent=5 // pred_region
        %s118 = ssub.s32 %s15, 1
        // Predicated region
        $region13: #{tpu_custom_call.1} parent=11 // pred_check
          %p119 = pneg %p48
        $region14: #{tpu_custom_call.1} parent=11 // pred_check_branch
          %121 = sbr.rel (%p119) target = $region16
        $region15: #{tpu_custom_call.1} parent=11 // pred_region
          %s123 = ssub.s32 16, 16
          %124 = vsyncadd [#allocation5], %s123
          %s126 = sshll.u32 [#allocation4], 4
          %s127 = int_to_ptr.vmem [resolvable:$true] %s126
          %129 = dma.hbm_to_vmem [thread:$0]  %s0, 16, %s127, [#allocation5]
        $region16: #{tpu_custom_call.1} parent=11 // pred_fallthru
          _
      $region12: #{tpu_custom_call.1} parent=5 // pred_fallthru
        _
      %p130 = scmp.lt.s32.totalorder %s15, 2
      // Predicated region
      $region17: #{tpu_custom_call.1} parent=5 // pred_check
        %p131 = pneg %p130
      $region18: #{tpu_custom_call.1} parent=5 // pred_check_branch
        %133 = sbr.rel (%p131) target = $region20
      $region19: #{tpu_custom_call.1} parent=5 // pred_region
        // Predicated region
        $region21: #{tpu_custom_call.1} parent=19 // pred_check
          %p134 = pneg %p70
        $region22: #{tpu_custom_call.1} parent=19 // pred_check_branch
          %136 = sbr.rel (%p134) target = $region24
        $region23: #{tpu_custom_call.1} parent=19 // pred_region
          %s137 = sand.u32 %s60, 1
          %s138 = scalar_lea.sflag [#allocation8], %s137
          %s139 = sand.u32 %s60, 1
          %s140 = smul.addr %s139, 8
          %s141 = scalar_lea.vmem [#allocation7], %s140
          %s143 = ssub.s32 128, 128
          %144 = vsyncadd %s138, %s143
          %s145 = sadd.s32 %s22, %s23
          %s146 = smul.addr %s145, 128
          %s147 = scalar_lea.hbm %s1, %s146
          %s149 = sshll.u32 %s141, 4
          %s150 = int_to_ptr.vmem [resolvable:$true] %s149
          %152 = dma.hbm_to_vmem [thread:$0]  %s147, 128, %s150, %s138
        $region24: #{tpu_custom_call.1} parent=19 // pred_fallthru
          _
      $region20: #{tpu_custom_call.1} parent=5 // pred_fallthru
        _
      %p153 = scmp.le.s32.totalorder 1, %s15
      %p154 = scmp.lt.s32.totalorder %s15, 3
      %p155 = pnand %p153, %p154
      %p156 = pneg %p155
      // Predicated region
      $region25: #{tpu_custom_call.1} parent=5 // pred_check
        _
      $region26: #{tpu_custom_call.1} parent=5 // pred_check_branch
        %158 = sbr.rel (%p155) target = $region28
      $region27: #{tpu_custom_call.1} parent=5 // pred_region
        %s159 = ssub.s32 %s15, 1
        // Predicated region
        $region29: #{tpu_custom_call.1} parent=27 // pred_check
          %p160 = pneg %p48
        $region30: #{tpu_custom_call.1} parent=27 // pred_check_branch
          %162 = sbr.rel (%p160) target = $region32
        $region31: #{tpu_custom_call.1} parent=27 // pred_region
          %163 = dma.done [#allocation5], 16
        $region32: #{tpu_custom_call.1} parent=27 // pred_fallthru
          _
        %s164 = sand.u32 %s63, 1
        %s165 = scalar_lea.sflag [#allocation8], %s164
        %s166 = sand.u32 %s63, 1
        %s167 = smul.addr %s166, 8
        %s168 = scalar_lea.vmem [#allocation7], %s167
        // Predicated region
        $region33: #{tpu_custom_call.1} parent=27 // pred_check
          %p169 = pneg %p76
        $region34: #{tpu_custom_call.1} parent=27 // pred_check_branch
          %171 = sbr.rel (%p169) target = $region36
        $region35: #{tpu_custom_call.1} parent=27 // pred_region
          %172 = dma.done %s165, 128
        $region36: #{tpu_custom_call.1} parent=27 // pred_fallthru
          _
        %p173 = pneg %p48
        %p174 = pneg %p45
        %s175 = sand.u32 %s63, 1
        %s176 = scalar_lea.sflag [#allocation8], %s175
        %s177 = sand.u32 %s63, 1
        %s178 = smul.addr %s177, 8
        %s179 = scalar_lea.vmem [#allocation7], %s178
        %p180 = pneg %p76
        %p181 = pneg %p73
        %p182 = pneg %p104
        %p183 = pneg %p101
        %s184 = sand.u32 %s91, 1
        %s185 = scalar_lea.sflag [#allocation6], %s184
        %s186 = sand.u32 %s91, 1
        %s187 = smul.addr %s186, 8
        %s188 = scalar_lea.vmem [#allocation9], %s187
        %p189 = scmp.eq.s32.totalorder %s25, 0
        // Predicated region
        $region37: #{tpu_custom_call.1} parent=27 // pred_check
          %p190 = pneg %p189
        $region38: #{tpu_custom_call.1} parent=27 // pred_check_branch
          %192 = sbr.rel (%p190) target = $region40
        $region39: #{tpu_custom_call.1} parent=27 // pred_region
          %s193 = smul.u32 %s24, 8
          %v194 = vlaneseq
          %v195 = vshrl.u32 %v194, 7
          %v196 = vstv %s193
          %v197 = vadd.s32 %v196, %v195
          %v198 = vcvt.s32.f32 %v197
          %v199 = vld [vmem:[#allocation4] sm:$0x1]
          %v201 = vlaneseq
          %v202 = vshrl.u32 %v201, 7
          %v203 = vsub.s32 0, %v202
          %v204 = vrot.slane %v199, %v203
          %v206 = vmul.f32 %v198, %v204
          %v207 = vand.u32 2147483647, %v206
          %vm208 = vcmp.le.f32.partialorder %v207, 0.7853982
          %vm209 = vcmp.lt.s32.totalorder %v206, 0
          %v210 = vand.u32 %v206, 2139095040
          %v211 = vshrl.u32 %v210, 23
          %v212 = vsub.s32 %v211, 127
          %v213 = vand.u32 2147483647, %v206
          %v214 = vand.u32 %v213, 8388607
          %v215 = vor.u32 %v214, 8388608
          %v216 = vsub.s32 0, %v215
          %v217 = vadd.s32 %v212, 1
          %vm218 = vcmp.gt.s32.totalorder %v217, 0
          %v219 = vsel %vm218, %v217, 0
          %v220 = vshrl.u32 %v219, 5
          %v221 = vand.u32 %v219, 31
          %v222 = vsub.s32 32, %v221
          %v223 = vshrl.u32 683565275, %v222
          %v224 = vshll.u32 683565275, %v221
          %v225 = vshrl.u32 2475754826, %v222
          %v226 = vor.u32 %v224, %v225
          %v227 = vshll.u32 2475754826, %v221
          %v228 = vshrl.u32 2131351028, %v222
          %v229 = vor.u32 %v227, %v228
          %v230 = vshll.u32 2131351028, %v221
          %v231 = vshrl.u32 2102212464, %v222
          %v232 = vor.u32 %v230, %v231
          %v233 = vshll.u32 2102212464, %v221
          %v234 = vshrl.u32 920167782, %v222
          %v235 = vor.u32 %v233, %v234
          %v236 = vshll.u32 920167782, %v221
          %v237 = vshrl.u32 1326507024, %v222
          %v238 = vor.u32 %v236, %v237
          %vm239 = vcmp.lt.s32.totalorder %v220, 1
          %vm240 = vcmp.lt.s32.totalorder %v220, 2
          %vm241 = vcmp.lt.s32.totalorder %v220, 3
          %vm242 = vcmp.lt.s32.totalorder %v220, 4
          %v243 = vsel %vm239, %v223, %v226
          %v244 = vsel %vm242, %v232, 2102212464
          %v245 = vsel %vm241, %v229, %v244
          %v246 = vsel %vm240, %v243, %v245
          %v247 = vsel %vm239, %v226, %v229
          %v248 = vsel %vm242, %v235, 920167782
          %v249 = vsel %vm241, %v232, %v248
          %v250 = vsel %vm240, %v247, %v249
          %v251 = vsel %vm239, %v229, %v232
          %v252 = vsel %vm242, %v238, 1326507024
          %v253 = vsel %vm241, %v235, %v252
          %v254 = vsel %vm240, %v251, %v253
          %v255 = vshll.u32 %v215, 8
          %v256 = vmul.u32.u64.compose %v255, %v254
          %v257 = vextract.low.u32 %v256
          %v258 = vextract.high.u32 %v256
          %v259 = vmul.u32.u64.compose %v255, %v250
          %v260 = vextract.low.u32 %v259
          %v261 = vextract.high.u32 %v259
          %v262 = vmul.u32 %v255, %v246
          %v263 = vadd.s32 %v258, %v260
          %vm264 = vc.u32 %v258, %v260
          %v265 = vadd.s32 %v261, 1
          %v266 = vsel %vm264, %v265, %v261
          %v267 = vadd.s32 %v262, %v266
          %v268 = vadd.s32 %v267, 536870912
          %v269 = vshrl.u32 %v268, 30
          %v270 = vshll.u32 %v269, 30
          %v271 = vsub.s32 %v267, %v270
          %vm272 = vcmp.lt.s32.totalorder %v271, 0
          %v273 = vsub.s32 0, %v271
          %v274 = vsel %vm272, %v273, %v271
          %v275 = vclz %v274
          %v276 = vsub.s32 %v275, 2
          %vm277 = vcmp.gt.s32.totalorder 0, %v276
          %v278 = vsel %vm277, 0, %v276
          %v279 = vsub.s32 32, %v278
          %v280 = vshll.u32 %v271, %v278
          %v281 = vshrl.u32 %v263, %v279
          %v282 = vor.u32 %v280, %v281
          %v283 = vsub.s32 4294967266, %v278
          %v284 = vadd.s32 %v283, 127
          %v285 = vshll.u32 %v284, 23
          %v286 = vor.u32 4788187, %v285
          %v287 = vand.u32 2147483647, %v286
          %v289 = vcvt.s32.f32 %v282
          %v290 = vmul.f32 %v289, %v287
          %v291 = vxor.u32 %v290, 2147483648
          %v292 = vsel %vm209, %v291, %v290
          %v293 = vsub.s32 4, %v269
          %v294 = vsel %vm209, %v293, %v269
          %v295 = vsel %vm208, %v206, %v292
          %v296 = vsel %vm208, 0, %v294
          %v297 = vcosq.f32.pop %v295
          %v298 = vsinq.f32.pop %v295
          %vm299 = vweird.f32 %v206
          %v300 = vand.u32 %v296, 3
          %vm301 = vcmp.lt.s32.totalorder %v300, 2
          %vm302 = vcmp.eq.s32.totalorder %v300, 0
          %v303 = vxor.u32 %v298, 2147483648
          %v304 = vsel %vm302, %v297, %v303
          %vm305 = vcmp.eq.s32.totalorder %v300, 2
          %v306 = vxor.u32 %v297, 2147483648
          %v307 = vsel %vm305, %v306, %v298
          %v308 = vsel %vm301, %v304, %v307
          %v309 = vsel %vm299, nan, %v308
          %vm310 = vcmask 130048
          %311 = vst.msk [vmem:[#allocation2] sm:$0xff] %vm310, %v309
          %v312 = vand.u32 2147483647, %v206
          %vm313 = vcmp.le.f32.partialorder %v312, 0.7853982
          %vm314 = vcmp.lt.s32.totalorder %v206, 0
          %v315 = vand.u32 %v206, 2139095040
          %v316 = vshrl.u32 %v315, 23
          %v317 = vsub.s32 %v316, 127
          %v318 = vand.u32 2147483647, %v206
          %v319 = vand.u32 %v318, 8388607
          %v320 = vor.u32 %v319, 8388608
          %v321 = vsub.s32 0, %v320
          %v322 = vadd.s32 %v317, 1
          %vm323 = vcmp.gt.s32.totalorder %v322, 0
          %v324 = vsel %vm323, %v322, 0
          %v325 = vshrl.u32 %v324, 5
          %v326 = vand.u32 %v324, 31
          %v327 = vsub.s32 32, %v326
          %v328 = vshrl.u32 683565275, %v327
          %v329 = vshll.u32 683565275, %v326
          %v330 = vshrl.u32 2475754826, %v327
          %v331 = vor.u32 %v329, %v330
          %v332 = vshll.u32 2475754826, %v326
          %v333 = vshrl.u32 2131351028, %v327
          %v334 = vor.u32 %v332, %v333
          %v335 = vshll.u32 2131351028, %v326
          %v336 = vshrl.u32 2102212464, %v327
          %v337 = vor.u32 %v335, %v336
          %v338 = vshll.u32 2102212464, %v326
          %v339 = vshrl.u32 920167782, %v327
          %v340 = vor.u32 %v338, %v339
          %v341 = vshll.u32 920167782, %v326
          %v342 = vshrl.u32 1326507024, %v327
          %v343 = vor.u32 %v341, %v342
          %vm344 = vcmp.lt.s32.totalorder %v325, 1
          %vm345 = vcmp.lt.s32.totalorder %v325, 2
          %vm346 = vcmp.lt.s32.totalorder %v325, 3
          %vm347 = vcmp.lt.s32.totalorder %v325, 4
          %v348 = vsel %vm344, %v328, %v331
          %v349 = vsel %vm347, %v337, 2102212464
          %v350 = vsel %vm346, %v334, %v349
          %v351 = vsel %vm345, %v348, %v350
          %v352 = vsel %vm344, %v331, %v334
          %v353 = vsel %vm347, %v340, 920167782
          %v354 = vsel %vm346, %v337, %v353
          %v355 = vsel %vm345, %v352, %v354
          %v356 = vsel %vm344, %v334, %v337
          %v357 = vsel %vm347, %v343, 1326507024
          %v358 = vsel %vm346, %v340, %v357
          %v359 = vsel %vm345, %v356, %v358
          %v360 = vshll.u32 %v320, 8
          %v361 = vmul.u32.u64.compose %v360, %v359
          %v362 = vextract.low.u32 %v361
          %v363 = vextract.high.u32 %v361
          %v364 = vmul.u32.u64.compose %v360, %v355
          %v365 = vextract.low.u32 %v364
          %v366 = vextract.high.u32 %v364
          %v367 = vmul.u32 %v360, %v351
          %v368 = vadd.s32 %v363, %v365
          %vm369 = vc.u32 %v363, %v365
          %v370 = vadd.s32 %v366, 1
          %v371 = vsel %vm369, %v370, %v366
          %v372 = vadd.s32 %v367, %v371
          %v373 = vadd.s32 %v372, 536870912
          %v374 = vshrl.u32 %v373, 30
          %v375 = vshll.u32 %v374, 30
          %v376 = vsub.s32 %v372, %v375
          %vm377 = vcmp.lt.s32.totalorder %v376, 0
          %v378 = vsub.s32 0, %v376
          %v379 = vsel %vm377, %v378, %v376
          %v380 = vclz %v379
          %v381 = vsub.s32 %v380, 2
          %vm382 = vcmp.gt.s32.totalorder 0, %v381
          %v383 = vsel %vm382, 0, %v381
          %v384 = vsub.s32 32, %v383
          %v385 = vshll.u32 %v376, %v383
          %v386 = vshrl.u32 %v368, %v384
          %v387 = vor.u32 %v385, %v386
          %v388 = vsub.s32 4294967266, %v383
          %v389 = vadd.s32 %v388, 127
          %v390 = vshll.u32 %v389, 23
          %v391 = vor.u32 4788187, %v390
          %v392 = vand.u32 2147483647, %v391
          %v394 = vcvt.s32.f32 %v387
          %v395 = vmul.f32 %v394, %v392
          %v396 = vxor.u32 %v395, 2147483648
          %v397 = vsel %vm314, %v396, %v395
          %v398 = vsub.s32 4, %v374
          %v399 = vsel %vm314, %v398, %v374
          %v400 = vsel %vm313, %v206, %v397
          %v401 = vsel %vm313, 0, %v399
          %v402 = vcosq.f32.pop %v400
          %v403 = vsinq.f32.pop %v400
          %vm404 = vweird.f32 %v206
          %v405 = vadd.s32 %v401, 3
          %v406 = vand.u32 %v405, 3
          %vm407 = vcmp.lt.s32.totalorder %v406, 2
          %vm408 = vcmp.eq.s32.totalorder %v406, 0
          %v409 = vxor.u32 %v403, 2147483648
          %v410 = vsel %vm408, %v402, %v409
          %vm411 = vcmp.eq.s32.totalorder %v406, 2
          %v412 = vxor.u32 %v402, 2147483648
          %v413 = vsel %vm411, %v412, %v403
          %v414 = vsel %vm407, %v410, %v413
          %v415 = vsel %vm404, nan, %v414
          %416 = vst.msk [vmem:[#allocation3] sm:$0xff] %vm310, %v415
        $region40: #{tpu_custom_call.1} parent=27 // pred_fallthru
          _
        %v417 = vld [vmem:[#allocation2] sm:$0xff]
        %v418 = vld [vmem:[#allocation3] sm:$0xff]
        %v419 = vld [vmem:[%s168] sm:$0xff]
        %v420 = vmul.f32 %v419, %v417
        %422 = vrot.lane.b32.xlu0 %v418, 16
        %v423 = vpop.permute.xlu0 %422
        %v425 = vmul.f32 %v419, %v423
        %427 = vrot.lane.b32.xlu0 %v425, 112
        %v428 = vpop.permute.xlu0 %427
        %v430 = vsub.f32 %v420, %v428
        %vm431 = vcmask 130048
        %432 = vst.msk [vmem:[%s188] sm:$0xff] %vm431, %v430
        %434 = vrot.lane.b32.xlu0 %v417, 16
        %v435 = vpop.permute.xlu0 %434
        %v437 = vmul.f32 %v419, %v435
        %v438 = vmul.f32 %v419, %v418
        %440 = vrot.lane.b32.xlu0 %v438, 16
        %v441 = vpop.permute.xlu0 %440
        %v443 = vadd.f32 %v437, %v441
        %vm444 = vcmask 261248
        %445 = vst.msk [vmem:[%s188] sm:$0xff] %vm444, %v443
        %s446 = sand.u32 %s91, 1
        %s447 = scalar_lea.sflag [#allocation6], %s446
        %s448 = sand.u32 %s91, 1
        %s449 = smul.addr %s448, 8
        %s450 = scalar_lea.vmem [#allocation9], %s449
        // Predicated region
        $region41: #{tpu_custom_call.1} parent=27 // pred_check
          %p451 = pneg %p101
        $region42: #{tpu_custom_call.1} parent=27 // pred_check_branch
          %453 = sbr.rel (%p451) target = $region44
        $region43: #{tpu_custom_call.1} parent=27 // pred_region
          %s455 = ssub.s32 128, 128
          %456 = vsyncadd %s447, %s455
          %s457 = sadd.s32 %s24, %s25
          %s458 = smul.addr %s457, 128
          %s459 = scalar_lea.hbm %s2, %s458
          %s461 = sshll.u32 %s450, 4
          %s462 = int_to_ptr.vmem [resolvable:$true] %s461
          %464 = dma.vmem_to_hbm [thread:$0]  %s462, 128, %s459, %s447
        $region44: #{tpu_custom_call.1} parent=27 // pred_fallthru
          _
      $region28: #{tpu_custom_call.1} parent=5 // pred_fallthru
        _
      %p465 = scmp.le.s32.totalorder 2, %s15
      // Predicated region
      $region45: #{tpu_custom_call.1} parent=5 // pred_check
        %p466 = pneg %p465
      $region46: #{tpu_custom_call.1} parent=5 // pred_check_branch
        %468 = sbr.rel (%p466) target = $region48
      $region47: #{tpu_custom_call.1} parent=5 // pred_region
        %s469 = ssub.s32 %s15, 2
        // Predicated region
        $region49: #{tpu_custom_call.1} parent=47 // pred_check
          %p470 = pneg %p107
        $region50: #{tpu_custom_call.1} parent=47 // pred_check_branch
          %472 = sbr.rel (%p470) target = $region52
        $region51: #{tpu_custom_call.1} parent=47 // pred_region
          %s473 = sand.u32 %s92, 1
          %s474 = scalar_lea.sflag [#allocation6], %s473
          %s475 = sand.u32 %s92, 1
          %s476 = smul.addr %s475, 8
          %s477 = scalar_lea.vmem [#allocation9], %s476
          %478 = dma.done %s474, 128
        $region52: #{tpu_custom_call.1} parent=47 // pred_fallthru
          _
      $region48: #{tpu_custom_call.1} parent=5 // pred_fallthru
        _
    $region6: #{tpu_custom_call.1} parent=1 // loop_footer
      %s19 = sadd.s32 1, %s15
    $region7: #{tpu_custom_call.1} parent=1 // loop_footer_branch
      %14 = sbr.rel target = $region3
    $region8: #{tpu_custom_call.1} parent=1 // loop_exit
      _
    %479 = vsyncpa [#allocation5], 1
    %s480 = scalar_lea.sflag [#allocation5], 1
    %481 = vsyncpa %s480, 1
    %482 = vsyncpa [#allocation8], 1
    %s483 = scalar_lea.sflag [#allocation8], 1
    %484 = vsyncpa %s483, 1
    %485 = vsyncpa [#allocation6], 1
    %s486 = scalar_lea.sflag [#allocation6], 1
    %487 = vsyncpa %s486, 1

</llo_original>
